<compile_context>
chip_gen: v5e
topology: v5e:2x2
jax: 0.10.0
libtpu: 0.0.40
codegen_flags: <defaults>
</compile_context>

<pallas_src>
import functools

import jax
import jax.numpy as jnp
from jax import lax
from jax.experimental import pallas as pl
from jax.experimental.pallas import tpu as pltpu


def _round_up(v, m):
    return -(-v // m) * m


# ---------------------------------------------------------------------------
# Kernels
# ---------------------------------------------------------------------------

def _ln_tail(z, gamma, beta, eps, out_dtype):
    mean = jnp.mean(z, axis=-1, keepdims=True)
    zc = z - mean
    var = jnp.mean(zc * zc, axis=-1, keepdims=True)
    zn = zc * lax.rsqrt(var + eps)
    return (zn * gamma + beta).astype(out_dtype)


def _ffn_fused_kernel(x_ref, w1_ref, b1_ref, w2_ref, b2_ref, g_ref, beta_ref,
                      o_ref, *, eps):
    # Whole FFN for one token tile; W1/W2 stay VMEM-resident across the 1-D grid.
    x = x_ref[...]
    h = jnp.dot(x, w1_ref[...], preferred_element_type=jnp.float32) + b1_ref[...]
    h = jnp.maximum(h, 0.0)
    y = jnp.dot(h.astype(w2_ref.dtype), w2_ref[...],
                preferred_element_type=jnp.float32)
    # Dropout(p=0.0) == identity.  Residual + LayerNorm over features, in f32.
    z = x.astype(jnp.float32) + y + b2_ref[...]
    o_ref[...] = _ln_tail(z, g_ref[...], beta_ref[...], eps, o_ref.dtype)


def _ffn_chunked_kernel(x_ref, w1_ref, b1_ref, w2_ref, b2_ref, g_ref, beta_ref,
                        o_ref, y_acc_ref, *, eps):
    # Grid = (token tiles i, hidden-dim chunks j); axis 1 is a reduction over F.
    j = pl.program_id(1)
    x = x_ref[...]
    h = jnp.dot(x, w1_ref[...], preferred_element_type=jnp.float32) + b1_ref[...]
    h = jnp.maximum(h, 0.0)
    # (ReLU acts per hidden column, so chunking the hidden axis is exact.)
    yj = jnp.dot(h.astype(w2_ref.dtype), w2_ref[...],
                 preferred_element_type=jnp.float32)

    @pl.when(j == 0)
    def _first():                       # plain write: saves the zero-fill + read-add pass
        y_acc_ref[...] = yj

    @pl.when(j != 0)
    def _accum():
        y_acc_ref[...] += yj

    @pl.when(j == pl.num_programs(1) - 1)
    def _finalize():
        z = x.astype(jnp.float32) + y_acc_ref[...] + b2_ref[...]
        o_ref[...] = _ln_tail(z, g_ref[...], beta_ref[...], eps, o_ref.dtype)


# ---------------------------------------------------------------------------
# Tiling / VMEM heuristics
# ---------------------------------------------------------------------------

def _vmem_cap_bytes():
    """Per-generation usable VMEM cap (leaves Mosaic scratch/semaphore headroom)."""
    phys = None
    try:
        info = pltpu.get_tpu_info()
        phys = int(getattr(info, "vmem_capacity_bytes", 0)) or None
    except Exception:
        phys = None
    if phys is None:
        phys = 64 << 20                       # conservative: assume v7x-class per-TC VMEM
    if phys > (96 << 20):                     # v5e / v6e: 128 MiB physical
        cap = min(phys - (24 << 20), 104 << 20)
    else:                                     # v7x-class: never request the full 64 MiB
        cap = min(phys - (12 << 20), 56 << 20)
    return max(cap, 32 << 20)


def _vmem_est(tm, tf, D, resident, cd_size, out_size):
    weights = 4 * D * tf * cd_size            # W1 + W2 slabs, double-buffered
    x_tile = 2 * tm * D * cd_size             # x tile, double-buffered
    o_tile = 2 * tm * D * out_size            # out tile, double-buffered
    hidden = tm * tf * (4 + cd_size)          # f32 h + low-precision copy for 2nd matmul
    acc = 0 if resident else tm * D * 4       # f32 accumulator (chunked path only)
    ln_tmp = 3 * tm * D * 4                   # z / zc / zn temporaries
    small = 2 * (tf * 4 + 3 * D * 4)          # b1, b2, gamma, beta
    return weights + x_tile + o_tile + hidden + acc + ln_tmp + small


def _chunk_sizes(F, tf_max):
    """Descending multiples of 128 that divide F and are <= tf_max; [F] if none exist."""
    sizes = []
    d = (min(F, max(128, tf_max)) // 128) * 128
    while d >= 128:
        if F % d == 0:
            sizes.append(d)
        d -= 128
    return sizes or [F]


def _tm_candidates(M, tm_target, sub, min_tiles):
    """Descending token-tile sizes, balanced against M (minimal padding)."""
    tm_target = max(sub, min(_round_up(tm_target, sub), _round_up(M, sub)))
    nt = max(pl.cdiv(M, tm_target), min_tiles)
    cands = []
    while True:
        tmc = max(sub, _round_up(pl.cdiv(M, nt), sub))
        if not cands or tmc < cands[-1]:
            cands.append(tmc)
        if tmc <= max(sub, 128):
            break
        nt *= 2
    return cands


# ---------------------------------------------------------------------------
# Wrapper
# ---------------------------------------------------------------------------

def positionwise_ffn(x, w1, b1, w2, b2, gamma, beta, *,
                     eps=1e-5, tm=None, tf=None, compute_dtype=jnp.bfloat16):
    """x: (B, S, D). w1: (F, D, 1), b1: (F,), w2: (D, F, 1), b2: (D,) -- PyTorch Conv1d layout.

    Matmuls run in `compute_dtype` (default bf16, native MXU mode) with f32 accumulation;
    the residual + LayerNorm tail is always f32.  Pass tf < F to force hidden-dim chunking.
    """
    B, S, D = x.shape
    F = w1.shape[0]
    M = B * S

    cd = jnp.dtype(compute_dtype)
    cd_size = cd.itemsize
    out_dtype = x.dtype
    out_size = jnp.dtype(out_dtype).itemsize
    sub = 8 if cd_size >= 4 else 16           # sublane packing: 16 rows/tile for bf16

    # Conv1d(k=1) weight (out, in, 1) -> matmul weight (in, out); force the MXU dtype.
    w1m = jnp.transpose(w1[:, :, 0], (1, 0)).astype(cd)     # (D, F)
    w2m = jnp.transpose(w2[:, :, 0], (1, 0)).astype(cd)     # (F, D)
    b1m = b1.reshape(1, F).astype(jnp.float32)
    b2m = b2.reshape(1, D).astype(jnp.float32)
    g2 = gamma.reshape(1, D).astype(jnp.float32)
    be2 = beta.reshape(1, D).astype(jnp.float32)
    x2 = x.reshape(M, D).astype(cd)

    # ---- per-generation VMEM budget & tile selection -------------------------
    cap = _vmem_cap_bytes()
    usable = (cap * 3) // 4
    tm_target = tm if tm is not None else (1024 if cap >= (96 << 20) else 512)
    min_tiles = 2 if M >= 256 else 1          # keep both v7x TensorCores busy
    tm_cands = _tm_candidates(M, tm_target, sub, min_tiles)

    force_chunk = (tf is not None) and (tf < F)
    tf_forced = _chunk_sizes(F, tf)[0] if force_chunk else None
    if tf_forced == F:
        force_chunk = False

    chosen = None
    if not force_chunk:
        # Prefer VMEM-resident W1/W2: weights are streamed from HBM exactly once.
        for idx, tmc in enumerate(tm_cands):
            if idx > 0 and tmc < 256:
                break                          # don't trade away too much tm for residency
            if _vmem_est(tmc, F, D, True, cd_size, out_size) <= usable:
                chosen = (tmc, F, True)
                break
    if chosen is None:
        tf_list = [tf_forced] if force_chunk else _chunk_sizes(F, tf if tf else 1024)
        for tmc in tm_cands:
            for tfc in tf_list:
                if _vmem_est(tmc, tfc, D, False, cd_size, out_size) <= usable:
                    chosen = (tmc, tfc, False)
                    break
            if chosen is not None:
                break
        if chosen is None:                     # best effort at the smallest tiles
            chosen = (tm_cands[-1], tf_list[-1], False)

    tm_sel, tf_sel, resident = chosen
    grid_m = pl.cdiv(M, tm_sel)
    Mp = grid_m * tm_sel
    if Mp != M:
        x2 = jnp.pad(x2, ((0, Mp - M), (0, 0)))

    est = _vmem_est(tm_sel, tf_sel, D, resident, cd_size, out_size)
    vmem_limit = int(min(max(est * 5 // 4 + (4 << 20), 32 << 20), cap))

    if resident:
        grid_spec = pltpu.PrefetchScalarGridSpec(
            num_scalar_prefetch=0,
            grid=(grid_m,),
            in_specs=[
                pl.BlockSpec((tm_sel, D), lambda i: (i, 0)),   # x tile
                pl.BlockSpec((D, F), lambda i: (0, 0)),        # W1 (resident)
                pl.BlockSpec((1, F), lambda i: (0, 0)),        # b1
                pl.BlockSpec((F, D), lambda i: (0, 0)),        # W2 (resident)
                pl.BlockSpec((1, D), lambda i: (0, 0)),        # b2
                pl.BlockSpec((1, D), lambda i: (0, 0)),        # gamma
                pl.BlockSpec((1, D), lambda i: (0, 0)),        # beta
            ],
            out_specs=pl.BlockSpec((tm_sel, D), lambda i: (i, 0)),
        )
        kernel = functools.partial(_ffn_fused_kernel, eps=eps)
        dim_sem = ("parallel",)
    else:
        grid_spec = pltpu.PrefetchScalarGridSpec(
            num_scalar_prefetch=0,
            grid=(grid_m, F // tf_sel),
            in_specs=[
                pl.BlockSpec((tm_sel, D), lambda i, j: (i, 0)),   # x tile (constant over j)
                pl.BlockSpec((D, tf_sel), lambda i, j: (0, j)),   # W1 hidden slab
                pl.BlockSpec((1, tf_sel), lambda i, j: (0, j)),   # b1 hidden slab
                pl.BlockSpec((tf_sel, D), lambda i, j: (j, 0)),   # W2 hidden slab
                pl.BlockSpec((1, D), lambda i, j: (0, 0)),        # b2
                pl.BlockSpec((1, D), lambda i, j: (0, 0)),        # gamma
                pl.BlockSpec((1, D), lambda i, j: (0, 0)),        # beta
            ],
            out_specs=pl.BlockSpec((tm_sel, D), lambda i, j: (i, 0)),
            scratch_shapes=[pltpu.VMEM((tm_sel, D), jnp.float32)],
        )
        kernel = functools.partial(_ffn_chunked_kernel, eps=eps)
        dim_sem = ("parallel", "arbitrary")

    out2 = pl.pallas_call(
        kernel,
        out_shape=jax.ShapeDtypeStruct((Mp, D), out_dtype),
        grid_spec=grid_spec,
        compiler_params=pltpu.CompilerParams(
            dimension_semantics=dim_sem,
            vmem_limit_bytes=vmem_limit,
        ),
    )(x2, w1m, b1m, w2m, b2m, g2, be2)

    if Mp != M:
        out2 = out2[:M]
    return out2.reshape(B, S, D)


def _reference(x, w1, b1, w2, b2, gamma, beta, eps=1e-5):
    # Pure-JAX f32 reference mirroring the PyTorch forward exactly.
    h = jnp.einsum('bsd,fd->bsf', x, w1[:, :, 0]) + b1
    h = jnp.maximum(h, 0.0)
    y = jnp.einsum('bsf,df->bsd', h, w2[:, :, 0]) + b2
    z = x + y
    mean = jnp.mean(z, axis=-1, keepdims=True)
    var = jnp.mean((z - mean) ** 2, axis=-1, keepdims=True)
    return (z - mean) / jnp.sqrt(var + eps) * gamma + beta


if __name__ == "__main__":
    # Small shapes consistent with the module: in_feature=128, ffn_dim=256.
    B, S, D, Fdim = 2, 8, 128, 256
    key = jax.random.PRNGKey(0)
    kx, k1, kb1, k2, kb2 = jax.random.split(key, 5)

    x = jax.random.normal(kx, (B, S, D), dtype=jnp.float32)
    # Deterministic synthetic parameters (PyTorch Conv1d shapes: (out, in, 1)).
    w1 = jax.random.normal(k1, (Fdim, D, 1), dtype=jnp.float32) * 0.05
    b1 = jax.random.normal(kb1, (Fdim,), dtype=jnp.float32) * 0.05
    w2 = jax.random.normal(k2, (D, Fdim, 1), dtype=jnp.float32) * 0.05
    b2 = jax.random.normal(kb2, (D,), dtype=jnp.float32) * 0.05
    gamma = jnp.ones((D,), dtype=jnp.float32)   # nn.LayerNorm default init
    beta = jnp.zeros((D,), dtype=jnp.float32)

    ref = _reference(x, w1, b1, w2, b2, gamma, beta)

    # 1) Exact-precision path (f32 MXU), resident weights, fused kernel.
    out_f32 = jax.block_until_ready(
        positionwise_ffn(x, w1, b1, w2, b2, gamma, beta, compute_dtype=jnp.float32))
    assert out_f32.shape == (B, S, D)
    assert jnp.allclose(out_f32, ref, atol=1e-4, rtol=1e-4), "mismatch (f32, resident)"

    # 2) Default bf16 MXU path (intended mixed precision -> loosened tolerance).
    out_bf16 = jax.block_until_ready(positionwise_ffn(x, w1, b1, w2, b2, gamma, beta))
    assert jnp.allclose(out_bf16, ref, atol=5e-2, rtol=5e-2), "mismatch (bf16, resident)"

    # 3) Forced chunked/accumulator path (multi token-tile, multi F-chunk), f32 compute.
    out_ch = jax.block_until_ready(
        positionwise_ffn(x, w1, b1, w2, b2, gamma, beta, tm=8, tf=128,
                         compute_dtype=jnp.float32))
    assert jnp.allclose(out_ch, ref, atol=1e-4, rtol=1e-4), "mismatch (f32, chunked)"

    # 4) Ragged M (padding path): M = 10 tokens, default bf16.
    x_odd = x[:, :5]
    ref_odd = _reference(x_odd, w1, b1, w2, b2, gamma, beta)
    out_odd = jax.block_until_ready(positionwise_ffn(x_odd, w1, b1, w2, b2, gamma, beta))
    assert out_odd.shape == (B, 5, D)
    assert jnp.allclose(out_odd, ref_odd, atol=5e-2, rtol=5e-2), "mismatch (padded M)"

    print("KERNEL_OK")
</pallas_src>

<mosaic_0001>
module attributes {stable_mosaic.version = 11 : i64} {
  func.func @_ffn_fused_kernel(%arg0: i32, %arg1: memref<16x128xf32, #tpu.memory_space<vmem>>, %arg2: memref<128x256xf32, #tpu.memory_space<vmem>>, %arg3: memref<1x256xf32, #tpu.memory_space<vmem>>, %arg4: memref<256x128xf32, #tpu.memory_space<vmem>>, %arg5: memref<1x128xf32, #tpu.memory_space<vmem>>, %arg6: memref<1x128xf32, #tpu.memory_space<vmem>>, %arg7: memref<1x128xf32, #tpu.memory_space<vmem>>, %arg8: memref<16x128xf32, #tpu.memory_space<vmem>>) attributes {dimension_semantics = [#tpu.dimension_semantics<parallel>], iteration_bounds = array<i64: 1>, scalar_prefetch = 0 : i64, scratch_operands = 0 : i64, tpu.core_type = #tpu.core_type<tc>, window_params = [{transform_indices = @transform_0, window_bounds = array<i64: 16, 128>}, {pipeline_mode = #tpu.pipeline_mode<synchronous>, transform_indices = @transform_1, window_bounds = array<i64: 128, 256>}, {pipeline_mode = #tpu.pipeline_mode<synchronous>, transform_indices = @transform_2, window_bounds = array<i64: 1, 256>}, {pipeline_mode = #tpu.pipeline_mode<synchronous>, transform_indices = @transform_3, window_bounds = array<i64: 256, 128>}, {pipeline_mode = #tpu.pipeline_mode<synchronous>, transform_indices = @transform_4, window_bounds = array<i64: 1, 128>}, {pipeline_mode = #tpu.pipeline_mode<synchronous>, transform_indices = @transform_5, window_bounds = array<i64: 1, 128>}, {pipeline_mode = #tpu.pipeline_mode<synchronous>, transform_indices = @transform_6, window_bounds = array<i64: 1, 128>}, {transform_indices = @transform_7, window_bounds = array<i64: 16, 128>}]} {
    %c0 = arith.constant 0 : index
    %c0_0 = arith.constant 0 : index
    %0 = vector.load %arg1[%c0, %c0_0] : memref<16x128xf32, #tpu.memory_space<vmem>>, vector<16x128xf32>
    %c0_1 = arith.constant 0 : index
    %c0_2 = arith.constant 0 : index
    %1 = vector.load %arg2[%c0_1, %c0_2] : memref<128x256xf32, #tpu.memory_space<vmem>>, vector<128x256xf32>
    %cst = arith.constant dense<0.000000e+00> : vector<16x256xf32>
    %2 = tpu.matmul %0, %1, %cst {dimension_numbers = #tpu.dot_dimension_numbers<[1], [0], [0], [1], [0, 0, 1, 1], [], []>} : vector<16x128xf32>, vector<128x256xf32>, vector<16x256xf32> -> vector<16x256xf32>
    %c0_3 = arith.constant 0 : index
    %c0_4 = arith.constant 0 : index
    %3 = vector.load %arg3[%c0_3, %c0_4] : memref<1x256xf32, #tpu.memory_space<vmem>>, vector<1x256xf32>
    %4 = vector.broadcast %3 : vector<1x256xf32> to vector<16x256xf32>
    %5 = arith.addf %2, %4 : vector<16x256xf32>
    %cst_5 = arith.constant 0.000000e+00 : f32
    %6 = vector.broadcast %cst_5 : f32 to vector<16x256xf32>
    %7 = arith.maximumf %5, %6 : vector<16x256xf32>
    %c0_6 = arith.constant 0 : index
    %c0_7 = arith.constant 0 : index
    %8 = vector.load %arg4[%c0_6, %c0_7] : memref<256x128xf32, #tpu.memory_space<vmem>>, vector<256x128xf32>
    %cst_8 = arith.constant dense<0.000000e+00> : vector<16x128xf32>
    %9 = tpu.matmul %7, %8, %cst_8 {dimension_numbers = #tpu.dot_dimension_numbers<[1], [0], [0], [1], [0, 0, 1, 1], [], []>} : vector<16x256xf32>, vector<256x128xf32>, vector<16x128xf32> -> vector<16x128xf32>
    %10 = arith.addf %0, %9 : vector<16x128xf32>
    %c0_9 = arith.constant 0 : index
    %c0_10 = arith.constant 0 : index
    %11 = vector.load %arg5[%c0_9, %c0_10] : memref<1x128xf32, #tpu.memory_space<vmem>>, vector<1x128xf32>
    %12 = vector.broadcast %11 : vector<1x128xf32> to vector<16x128xf32>
    %13 = arith.addf %10, %12 : vector<16x128xf32>
    %c0_11 = arith.constant 0 : index
    %c0_12 = arith.constant 0 : index
    %14 = vector.load %arg6[%c0_11, %c0_12] : memref<1x128xf32, #tpu.memory_space<vmem>>, vector<1x128xf32>
    %c0_13 = arith.constant 0 : index
    %c0_14 = arith.constant 0 : index
    %15 = vector.load %arg7[%c0_13, %c0_14] : memref<1x128xf32, #tpu.memory_space<vmem>>, vector<1x128xf32>
    %cst_15 = arith.constant dense<0.000000e+00> : vector<16xf32>
    %16 = vector.multi_reduction <add>, %13, %cst_15 [1] : vector<16x128xf32> to vector<16xf32>
    %17 = vector.shape_cast %16 : vector<16xf32> to vector<16x1xf32>
    %cst_16 = arith.constant 1.280000e+02 : f32
    %18 = vector.broadcast %cst_16 : f32 to vector<16x1xf32>
    %19 = arith.divf %17, %18 : vector<16x1xf32>
    %20 = vector.broadcast %19 : vector<16x1xf32> to vector<16x128xf32>
    %21 = arith.subf %13, %20 : vector<16x128xf32>
    %22 = arith.mulf %21, %21 : vector<16x128xf32>
    %cst_17 = arith.constant dense<0.000000e+00> : vector<16xf32>
    %23 = vector.multi_reduction <add>, %22, %cst_17 [1] : vector<16x128xf32> to vector<16xf32>
    %24 = vector.shape_cast %23 : vector<16xf32> to vector<16x1xf32>
    %cst_18 = arith.constant 1.280000e+02 : f32
    %25 = vector.broadcast %cst_18 : f32 to vector<16x1xf32>
    %26 = arith.divf %24, %25 : vector<16x1xf32>
    %cst_19 = arith.constant 9.99999974E-6 : f32
    %27 = vector.broadcast %cst_19 : f32 to vector<16x1xf32>
    %28 = arith.addf %26, %27 : vector<16x1xf32>
    %29 = math.rsqrt %28 : vector<16x1xf32>
    %30 = vector.broadcast %29 : vector<16x1xf32> to vector<16x128xf32>
    %31 = arith.mulf %21, %30 : vector<16x128xf32>
    %32 = vector.broadcast %14 : vector<1x128xf32> to vector<16x128xf32>
    %33 = arith.mulf %31, %32 : vector<16x128xf32>
    %34 = vector.broadcast %15 : vector<1x128xf32> to vector<16x128xf32>
    %35 = arith.addf %33, %34 : vector<16x128xf32>
    %c0_20 = arith.constant 0 : index
    %c0_21 = arith.constant 0 : index
    %36 = vector.load %arg8[%c0_20, %c0_21] : memref<16x128xf32, #tpu.memory_space<vmem>>, vector<16x128xf32>
    tpu.vector_store %arg8[%c0_20, %c0_21], %35 {strides = array<i32>} : memref<16x128xf32, #tpu.memory_space<vmem>>, vector<16x128xf32>,
    return
  }
  func.func @transform_0(%arg0: i32) -> (i32, i32) {
    %c0_i32 = arith.constant 0 : i32
    %c0_i32_0 = arith.constant 0 : i32
    return %arg0, %c0_i32 : i32, i32
  }
  func.func @transform_1(%arg0: i32) -> (i32, i32) {
    %c0_i32 = arith.constant 0 : i32
    %c0_i32_0 = arith.constant 0 : i32
    %c0_i32_1 = arith.constant 0 : i32
    return %c0_i32, %c0_i32_0 : i32, i32
  }
  func.func @transform_2(%arg0: i32) -> (i32, i32) {
    %c0_i32 = arith.constant 0 : i32
    %c0_i32_0 = arith.constant 0 : i32
    %c0_i32_1 = arith.constant 0 : i32
    return %c0_i32, %c0_i32_0 : i32, i32
  }
  func.func @transform_3(%arg0: i32) -> (i32, i32) {
    %c0_i32 = arith.constant 0 : i32
    %c0_i32_0 = arith.constant 0 : i32
    %c0_i32_1 = arith.constant 0 : i32
    return %c0_i32, %c0_i32_0 : i32, i32
  }
  func.func @transform_4(%arg0: i32) -> (i32, i32) {
    %c0_i32 = arith.constant 0 : i32
    %c0_i32_0 = arith.constant 0 : i32
    %c0_i32_1 = arith.constant 0 : i32
    return %c0_i32, %c0_i32_0 : i32, i32
  }
  func.func @transform_5(%arg0: i32) -> (i32, i32) {
    %c0_i32 = arith.constant 0 : i32
    %c0_i32_0 = arith.constant 0 : i32
    %c0_i32_1 = arith.constant 0 : i32
    return %c0_i32, %c0_i32_0 : i32, i32
  }
  func.func @transform_6(%arg0: i32) -> (i32, i32) {
    %c0_i32 = arith.constant 0 : i32
    %c0_i32_0 = arith.constant 0 : i32
    %c0_i32_1 = arith.constant 0 : i32
    return %c0_i32, %c0_i32_0 : i32, i32
  }
  func.func @transform_7(%arg0: i32) -> (i32, i32) {
    %c0_i32 = arith.constant 0 : i32
    %c0_i32_0 = arith.constant 0 : i32
    return %arg0, %c0_i32 : i32, i32
  }
}

</mosaic_0001>

<llo_original>
// kernel: tpu_custom_call.1
$region0: #{tpu_custom_call.1}
  #allocation0 [shape = 'u32[]', space=smem, size = 0x4, offset = 0x4, fixed_abs, tag = 'smem constant byte address 0x4 - core index']
  #allocation1 [shape = 'u32[72,128]{1,0:T(1,128)}', space=vmem, size = 0x9000, scoped, tag = 'internal scratch']
  %s0 = inlined_call_operand.hbm [shape: f32[16,128], index: 0, kind: input, shape index: {}]
  %s1 = inlined_call_operand.hbm [shape: f32[128,256], index: 1, kind: input, shape index: {}]
  %s2 = inlined_call_operand.hbm [shape: f32[1,256], index: 2, kind: input, shape index: {}]
  %s3 = inlined_call_operand.hbm [shape: f32[256,128], index: 3, kind: input, shape index: {}]
  %s4 = inlined_call_operand.vmem [shape: f32[1,128], index: 4, kind: input, shape index: {}]
  %s5 = inlined_call_operand.vmem [shape: f32[1,128], index: 5, kind: input, shape index: {}]
  %s6 = inlined_call_operand.vmem [shape: f32[1,128], index: 6, kind: input, shape index: {}]
  %s7 = inlined_call_operand.hbm [shape: f32[16,128], index: 7, kind: output, shape index: {}]
  %s8 = sld [smem:[#allocation0]]
  $region54: #{tpu_custom_call.1} parent=0
    _
  %s10 = ssub.s32 1, %s8
  %s11 = scalar_select 0, %s10, %s8
  $region1: #{tpu_custom_call.1} parent=0
    #allocation2 [shape = 'u8[8192]{0}', space=vmem, size = 0x2000, scoped, tag = 'input window, operand 0, single buffered']
    #allocation3 [shape = 's32[1]{0}', space=sflag, size = 0x4, scoped, tag = 'scoped memory for tpu_custom_call.1']
    #allocation4 [shape = 's32[1]{0}', space=sflag, size = 0x4, scoped, tag = 'scoped memory for tpu_custom_call.1']
    #allocation5 [shape = 'u8[131072]{0}', space=vmem, size = 0x20000, scoped, tag = 'input window, operand 1, single buffered']
    #allocation6 [shape = 's32[1]{0}', space=sflag, size = 0x4, scoped, tag = 'scoped memory for tpu_custom_call.1']
    #allocation7 [shape = 'u8[1024]{0}', space=vmem, size = 0x400, scoped, tag = 'input window, operand 2, single buffered']
    #allocation8 [shape = 'u8[131072]{0}', space=vmem, size = 0x20000, scoped, tag = 'input window, operand 3, single buffered']
    #allocation9 [shape = 's32[1]{0}', space=sflag, size = 0x4, scoped, tag = 'scoped memory for tpu_custom_call.1']
    #allocation10 [shape = 'u8[8192]{0}', space=vmem, size = 0x2000, scoped, tag = 'output window, operand 0, single buffered']
    %12 = vsyncpa [#allocation3], 0
    %13 = vsyncpa [#allocation6], 0
    %14 = vsyncpa [#allocation9], 0
    %15 = vsyncpa [#allocation4], 0
    // Predicated region
    $region2: #{tpu_custom_call.1} parent=1 // pred_check
      _
    $region3: #{tpu_custom_call.1} parent=1 // pred_check_branch
      %17 = sbr.rel (0) target = $region5
    $region4: #{tpu_custom_call.1} parent=1 // pred_region
      %19 = vsyncadd [#allocation3], 0
      %s20 = sshll.u32 %s0, 4
      %s21 = int_to_ptr.hbm [resolvable:$true] %s20
      %s22 = sshll.u32 [#allocation2], 4
      %s23 = int_to_ptr.vmem [resolvable:$true] %s22
      %28 = dma.hbm_to_vmem [thread:$0]  %s21, 256, %s23, [#allocation3], 128, 128, 8
    $region5: #{tpu_custom_call.1} parent=1 // pred_fallthru
      _
    // Predicated region
    $region6: #{tpu_custom_call.1} parent=1 // pred_check
      _
    $region7: #{tpu_custom_call.1} parent=1 // pred_check_branch
      %30 = sbr.rel (0) target = $region9
    $region8: #{tpu_custom_call.1} parent=1 // pred_region
      %32 = vsyncadd [#allocation6], 0
      %s33 = sshll.u32 %s1, 4
      %s34 = int_to_ptr.hbm [resolvable:$true] %s33
      %s35 = sshll.u32 [#allocation5], 4
      %s36 = int_to_ptr.vmem [resolvable:$true] %s35
      %41 = dma.hbm_to_vmem [thread:$0]  %s34, 4096, %s36, [#allocation6], 256, 256, 16
    $region9: #{tpu_custom_call.1} parent=1 // pred_fallthru
      _
    // Predicated region
    $region10: #{tpu_custom_call.1} parent=1 // pred_check
      _
    $region11: #{tpu_custom_call.1} parent=1 // pred_check_branch
      %43 = sbr.rel (0) target = $region13
    $region12: #{tpu_custom_call.1} parent=1 // pred_region
      %45 = vsyncadd [#allocation6], 0
      %s47 = sshll.u32 %s2, 4
      %s48 = int_to_ptr.hbm [resolvable:$true] %s47
      %s49 = sshll.u32 [#allocation7], 4
      %s50 = int_to_ptr.vmem [resolvable:$true] %s49
      %52 = dma.hbm_to_vmem [thread:$0]  %s48, 32, %s50, [#allocation6]
    $region13: #{tpu_custom_call.1} parent=1 // pred_fallthru
      _
    // Predicated region
    $region14: #{tpu_custom_call.1} parent=1 // pred_check
      _
    $region15: #{tpu_custom_call.1} parent=1 // pred_check_branch
      %54 = sbr.rel (0) target = $region17
    $region16: #{tpu_custom_call.1} parent=1 // pred_region
      %56 = vsyncadd [#allocation9], 0
      %s57 = sshll.u32 %s3, 4
      %s58 = int_to_ptr.hbm [resolvable:$true] %s57
      %s59 = sshll.u32 [#allocation8], 4
      %s60 = int_to_ptr.vmem [resolvable:$true] %s59
      %65 = dma.hbm_to_vmem [thread:$0]  %s58, 4096, %s60, [#allocation9], 128, 128, 8
    $region17: #{tpu_custom_call.1} parent=1 // pred_fallthru
      _
    // Predicated region
    $region18: #{tpu_custom_call.1} parent=1 // pred_check
      _
    $region19: #{tpu_custom_call.1} parent=1 // pred_check_branch
      %67 = sbr.rel (0) target = $region21
    $region20: #{tpu_custom_call.1} parent=1 // pred_region
      _
    $region21: #{tpu_custom_call.1} parent=1 // pred_fallthru
      _
    // Predicated region
    $region22: #{tpu_custom_call.1} parent=1 // pred_check
      _
    $region23: #{tpu_custom_call.1} parent=1 // pred_check_branch
      %69 = sbr.rel (0) target = $region25
    $region24: #{tpu_custom_call.1} parent=1 // pred_region
      _
    $region25: #{tpu_custom_call.1} parent=1 // pred_fallthru
      _
    // Predicated region
    $region26: #{tpu_custom_call.1} parent=1 // pred_check
      _
    $region27: #{tpu_custom_call.1} parent=1 // pred_check_branch
      %71 = sbr.rel (0) target = $region29
    $region28: #{tpu_custom_call.1} parent=1 // pred_region
      _
    $region29: #{tpu_custom_call.1} parent=1 // pred_fallthru
      _
    // Predicated region
    $region30: #{tpu_custom_call.1} parent=1 // pred_check
      _
    $region31: #{tpu_custom_call.1} parent=1 // pred_check_branch
      %73 = sbr.rel (0) target = $region33
    $region32: #{tpu_custom_call.1} parent=1 // pred_region
      %75 = dma.done [#allocation3], 256
    $region33: #{tpu_custom_call.1} parent=1 // pred_fallthru
      _
    // Predicated region
    $region34: #{tpu_custom_call.1} parent=1 // pred_check
      _
    $region35: #{tpu_custom_call.1} parent=1 // pred_check_branch
      %77 = sbr.rel (0) target = $region37
    $region36: #{tpu_custom_call.1} parent=1 // pred_region
      %79 = dma.done [#allocation6], 4096
    $region37: #{tpu_custom_call.1} parent=1 // pred_fallthru
      _
    // Predicated region
    $region38: #{tpu_custom_call.1} parent=1 // pred_check
      _
    $region39: #{tpu_custom_call.1} parent=1 // pred_check_branch
      %81 = sbr.rel (0) target = $region41
    $region40: #{tpu_custom_call.1} parent=1 // pred_region
      %83 = dma.done [#allocation6], 32
    $region41: #{tpu_custom_call.1} parent=1 // pred_fallthru
      _
    // Predicated region
    $region42: #{tpu_custom_call.1} parent=1 // pred_check
      _
    $region43: #{tpu_custom_call.1} parent=1 // pred_check_branch
      %85 = sbr.rel (0) target = $region45
    $region44: #{tpu_custom_call.1} parent=1 // pred_region
      %87 = dma.done [#allocation9], 4096
    $region45: #{tpu_custom_call.1} parent=1 // pred_fallthru
      _
    %v88 = vld [vmem:[#allocation2] sm:$0xff]
    %v89 = vld [vmem:[#allocation2 + $0x8] sm:$0xff]
    %v90 = vld [vmem:[#allocation5] sm:$0xff]
    %v91 = vld [vmem:[#allocation5 + $0x8] sm:$0xff]
    %v92 = vld [vmem:[#allocation5 + $0x10] sm:$0xff]
    %v93 = vld [vmem:[#allocation5 + $0x18] sm:$0xff]
    %v94 = vld [vmem:[#allocation5 + $0x20] sm:$0xff]
    %v95 = vld [vmem:[#allocation5 + $0x28] sm:$0xff]
    %v96 = vld [vmem:[#allocation5 + $0x30] sm:$0xff]
    %v97 = vld [vmem:[#allocation5 + $0x38] sm:$0xff]
    %v98 = vld [vmem:[#allocation5 + $0x40] sm:$0xff]
    %v99 = vld [vmem:[#allocation5 + $0x48] sm:$0xff]
    %v100 = vld [vmem:[#allocation5 + $0x50] sm:$0xff]
    %v101 = vld [vmem:[#allocation5 + $0x58] sm:$0xff]
    %v102 = vld [vmem:[#allocation5 + $0x60] sm:$0xff]
    %v103 = vld [vmem:[#allocation5 + $0x68] sm:$0xff]
    %v104 = vld [vmem:[#allocation5 + $0x70] sm:$0xff]
    %v105 = vld [vmem:[#allocation5 + $0x78] sm:$0xff]
    %v106 = vld [vmem:[#allocation5 + $0x80] sm:$0xff]
    %v107 = vld [vmem:[#allocation5 + $0x88] sm:$0xff]
    %v108 = vld [vmem:[#allocation5 + $0x90] sm:$0xff]
    %v109 = vld [vmem:[#allocation5 + $0x98] sm:$0xff]
    %v110 = vld [vmem:[#allocation5 + $0xa0] sm:$0xff]
    %v111 = vld [vmem:[#allocation5 + $0xa8] sm:$0xff]
    %v112 = vld [vmem:[#allocation5 + $0xb0] sm:$0xff]
    %v113 = vld [vmem:[#allocation5 + $0xb8] sm:$0xff]
    %v114 = vld [vmem:[#allocation5 + $0xc0] sm:$0xff]
    %v115 = vld [vmem:[#allocation5 + $0xc8] sm:$0xff]
    %v116 = vld [vmem:[#allocation5 + $0xd0] sm:$0xff]
    %v117 = vld [vmem:[#allocation5 + $0xd8] sm:$0xff]
    %v118 = vld [vmem:[#allocation5 + $0xe0] sm:$0xff]
    %v119 = vld [vmem:[#allocation5 + $0xe8] sm:$0xff]
    %v120 = vld [vmem:[#allocation5 + $0xf0] sm:$0xff]
    %v121 = vld [vmem:[#allocation5 + $0xf8] sm:$0xff]
    %v122 = vld [vmem:[#allocation7] sm:$0x3]
    %v124 = vperm.slane %v122, 0
    %v125 = vperm.slane %v122, 1
    %128 = vmatpush.msra.mxu0 %v120
    %129 = vmatpush.msra.mxu0 %v118
    %130 = vmatpush.msra.mxu0 %v116
    %131 = vmatpush.msra.mxu0 %v114
    %132 = vmatpush.msra.mxu0 %v112
    %133 = vmatpush.msra.mxu0 %v110
    %134 = vmatpush.msra.mxu0 %v108
    %135 = vmatpush.msra.mxu0 %v106
    %136 = vmatpush.msra.mxu0 %v104
    %137 = vmatpush.msra.mxu0 %v102
    %138 = vmatpush.msra.mxu0 %v100
    %139 = vmatpush.msra.mxu0 %v98
    %140 = vmatpush.msra.mxu0 %v96
    %141 = vmatpush.msra.mxu0 %v94
    %142 = vmatpush.msra.mxu0 %v92
    %143 = vmatpush.msra.mxu0 %v90
    %144 = vmatmul.f32.gmra.mxu0 %v88
    %v145 = vpop.f32.mrf.mxu0
    %v146 = vadd.f32 %v124, %v145
    %147 = vmatmul.f32.gmra.mxu0 %v89
    %v148 = vpop.f32.mrf.mxu0
    %v149 = vadd.f32 %v124, %v148
    %150 = vdwg.mxu0
    %151 = vmatpush.msra.mxu0 %v121
    %152 = vmatpush.msra.mxu0 %v119
    %153 = vmatpush.msra.mxu0 %v117
    %154 = vmatpush.msra.mxu0 %v115
    %155 = vmatpush.msra.mxu0 %v113
    %156 = vmatpush.msra.mxu0 %v111
    %157 = vmatpush.msra.mxu0 %v109
    %158 = vmatpush.msra.mxu0 %v107
    %159 = vmatpush.msra.mxu0 %v105
    %160 = vmatpush.msra.mxu0 %v103
    %161 = vmatpush.msra.mxu0 %v101
    %162 = vmatpush.msra.mxu0 %v99
    %163 = vmatpush.msra.mxu0 %v97
    %164 = vmatpush.msra.mxu0 %v95
    %165 = vmatpush.msra.mxu0 %v93
    %166 = vmatpush.msra.mxu0 %v91
    %167 = vmatmul.f32.gmra.mxu0 %v88
    %v168 = vpop.f32.mrf.mxu0
    %v169 = vadd.f32 %v125, %v168
    %170 = vmatmul.f32.gmra.mxu0 %v89
    %v171 = vpop.f32.mrf.mxu0
    %v172 = vadd.f32 %v125, %v171
    %173 = vdwg.mxu0
    %v174 = vmax.f32 %v146, 0.0
    %v175 = vmax.f32 %v169, 0.0
    %v176 = vmax.f32 %v149, 0.0
    %v177 = vmax.f32 %v172, 0.0
    %v178 = vld [vmem:[#allocation8] sm:$0xff]
    %v179 = vld [vmem:[#allocation8 + $0x8] sm:$0xff]
    %v180 = vld [vmem:[#allocation8 + $0x10] sm:$0xff]
    %v181 = vld [vmem:[#allocation8 + $0x18] sm:$0xff]
    %v182 = vld [vmem:[#allocation8 + $0x20] sm:$0xff]
    %v183 = vld [vmem:[#allocation8 + $0x28] sm:$0xff]
    %v184 = vld [vmem:[#allocation8 + $0x30] sm:$0xff]
    %v185 = vld [vmem:[#allocation8 + $0x38] sm:$0xff]
    %v186 = vld [vmem:[#allocation8 + $0x40] sm:$0xff]
    %v187 = vld [vmem:[#allocation8 + $0x48] sm:$0xff]
    %v188 = vld [vmem:[#allocation8 + $0x50] sm:$0xff]
    %v189 = vld [vmem:[#allocation8 + $0x58] sm:$0xff]
    %v190 = vld [vmem:[#allocation8 + $0x60] sm:$0xff]
    %v191 = vld [vmem:[#allocation8 + $0x68] sm:$0xff]
    %v192 = vld [vmem:[#allocation8 + $0x70] sm:$0xff]
    %v193 = vld [vmem:[#allocation8 + $0x78] sm:$0xff]
    %v194 = vld [vmem:[#allocation8 + $0x80] sm:$0xff]
    %v195 = vld [vmem:[#allocation8 + $0x88] sm:$0xff]
    %v196 = vld [vmem:[#allocation8 + $0x90] sm:$0xff]
    %v197 = vld [vmem:[#allocation8 + $0x98] sm:$0xff]
    %v198 = vld [vmem:[#allocation8 + $0xa0] sm:$0xff]
    %v199 = vld [vmem:[#allocation8 + $0xa8] sm:$0xff]
    %v200 = vld [vmem:[#allocation8 + $0xb0] sm:$0xff]
    %v201 = vld [vmem:[#allocation8 + $0xb8] sm:$0xff]
    %v202 = vld [vmem:[#allocation8 + $0xc0] sm:$0xff]
    %v203 = vld [vmem:[#allocation8 + $0xc8] sm:$0xff]
    %v204 = vld [vmem:[#allocation8 + $0xd0] sm:$0xff]
    %v205 = vld [vmem:[#allocation8 + $0xd8] sm:$0xff]
    %v206 = vld [vmem:[#allocation8 + $0xe0] sm:$0xff]
    %v207 = vld [vmem:[#allocation8 + $0xe8] sm:$0xff]
    %v208 = vld [vmem:[#allocation8 + $0xf0] sm:$0xff]
    %v209 = vld [vmem:[#allocation8 + $0xf8] sm:$0xff]
    %210 = vmatpush.msra.mxu0 %v193
    %211 = vmatpush.msra.mxu0 %v192
    %212 = vmatpush.msra.mxu0 %v191
    %213 = vmatpush.msra.mxu0 %v190
    %214 = vmatpush.msra.mxu0 %v189
    %215 = vmatpush.msra.mxu0 %v188
    %216 = vmatpush.msra.mxu0 %v187
    %217 = vmatpush.msra.mxu0 %v186
    %218 = vmatpush.msra.mxu0 %v185
    %219 = vmatpush.msra.mxu0 %v184
    %220 = vmatpush.msra.mxu0 %v183
    %221 = vmatpush.msra.mxu0 %v182
    %222 = vmatpush.msra.mxu0 %v181
    %223 = vmatpush.msra.mxu0 %v180
    %224 = vmatpush.msra.mxu0 %v179
    %225 = vmatpush.msra.mxu0 %v178
    %226 = vmatmul.f32.gmra.mxu0 %v174
    %v227 = vpop.f32.mrf.mxu0
    %v228 = vadd.f32 0.0, %v227
    %229 = vmatmul.f32.gmra.mxu0 %v176
    %v230 = vpop.f32.mrf.mxu0
    %v231 = vadd.f32 0.0, %v230
    %232 = vdwg.mxu0
    %233 = vmatpush.msra.mxu0 %v209
    %234 = vmatpush.msra.mxu0 %v208
    %235 = vmatpush.msra.mxu0 %v207
    %236 = vmatpush.msra.mxu0 %v206
    %237 = vmatpush.msra.mxu0 %v205
    %238 = vmatpush.msra.mxu0 %v204
    %239 = vmatpush.msra.mxu0 %v203
    %240 = vmatpush.msra.mxu0 %v202
    %241 = vmatpush.msra.mxu0 %v201
    %242 = vmatpush.msra.mxu0 %v200
    %243 = vmatpush.msra.mxu0 %v199
    %244 = vmatpush.msra.mxu0 %v198
    %245 = vmatpush.msra.mxu0 %v197
    %246 = vmatpush.msra.mxu0 %v196
    %247 = vmatpush.msra.mxu0 %v195
    %248 = vmatpush.msra.mxu0 %v194
    %249 = vmatmul.f32.gmra.mxu0 %v175
    %v250 = vpop.f32.mrf.mxu0
    %v251 = vadd.f32 %v228, %v250
    %252 = vmatmul.f32.gmra.mxu0 %v177
    %v253 = vpop.f32.mrf.mxu0
    %v254 = vadd.f32 %v231, %v253
    %255 = vdwg.mxu0
    %v256 = vadd.f32 %v88, %v251
    %v257 = vadd.f32 %v89, %v254
    %v258 = vld [vmem:[%s4] sm:$0x1]
    %v260 = vperm.slane %v258, 0
    %v262 = vadd.f32 %v256, %v260
    %v263 = vadd.f32 %v257, %v260
    %v264 = vld [vmem:[%s5] sm:$0x1]
    %v265 = vld [vmem:[%s6] sm:$0x1]
    %266 = vadd.xlane.f32.xlu0 %v262
    %v267 = vpop.xlane.xlu0 %266
    %268 = vadd.xlane.f32.xlu0 %v263
    %v269 = vpop.xlane.xlu0 %268
    %v270 = vrcp.pop 128.0
    %v271 = vmul.f32 128.0, %v270
    %v272 = vsub.f32 1.0, %v271
    %v273 = vmul.f32 %v270, %v272
    %v274 = vadd.f32 %v270, %v273
    %vm275 = vweird.f32 %v270
    %v276 = vsel %vm275, %v270, %v274
    %v277 = vmul.f32 %v267, %v276
    %v278 = vmul.f32 %v269, %v276
    %v279 = vsub.f32 %v262, %v277
    %v280 = vsub.f32 %v263, %v278
    %v281 = vmul.f32 %v279, %v279
    %v282 = vmul.f32 %v280, %v280
    %283 = vadd.xlane.f32.xlu0 %v281
    %v284 = vpop.xlane.xlu0 %283
    %285 = vadd.xlane.f32.xlu0 %v282
    %v286 = vpop.xlane.xlu0 %285
    %v287 = vmul.f32 %v284, %v276
    %v288 = vmul.f32 %v286, %v276
    %v289 = vadd.f32 %v287, 1e-05
    %v290 = vadd.f32 %v288, 1e-05
    %v291 = vrsqrt.pop %v289
    %v292 = vmul.f32 %v291, %v289
    %v293 = vmul.f32 %v292, %v291
    %v294 = vmul.f32 0.5, %v293
    %v295 = vsub.f32 1.5, %v294
    %v296 = vmul.f32 %v291, %v295
    %vm297 = vweird.f32 %v289
    %vm298 = vweird.f32 %v291
    %vm299 = vmor %vm297, %vm298
    %v300 = vsel %vm299, %v291, %v296
    %v301 = vrsqrt.pop %v290
    %v302 = vmul.f32 %v301, %v290
    %v303 = vmul.f32 %v302, %v301
    %v304 = vmul.f32 0.5, %v303
    %v305 = vsub.f32 1.5, %v304
    %v306 = vmul.f32 %v301, %v305
    %vm307 = vweird.f32 %v290
    %vm308 = vweird.f32 %v301
    %vm309 = vmor %vm307, %vm308
    %v310 = vsel %vm309, %v301, %v306
    %v311 = vmul.f32 %v279, %v300
    %v312 = vmul.f32 %v280, %v310
    %v314 = vperm.slane %v264, 0
    %v316 = vmul.f32 %v311, %v314
    %v317 = vmul.f32 %v312, %v314
    %v319 = vperm.slane %v265, 0
    %v321 = vadd.f32 %v316, %v319
    %v322 = vadd.f32 %v317, %v319
    %323 = vst [vmem:[#allocation10] sm:$0xff] %v321
    %324 = vst [vmem:[#allocation10 + $0x8] sm:$0xff] %v322
    // Predicated region
    $region46: #{tpu_custom_call.1} parent=1 // pred_check
      _
    $region47: #{tpu_custom_call.1} parent=1 // pred_check_branch
      %326 = sbr.rel (0) target = $region49
    $region48: #{tpu_custom_call.1} parent=1 // pred_region
      %328 = vsyncadd [#allocation4], 0
      %s329 = sshll.u32 [#allocation10], 4
      %s330 = int_to_ptr.vmem [resolvable:$true] %s329
      %s331 = sshll.u32 %s7, 4
      %s332 = int_to_ptr.hbm [resolvable:$true] %s331
      %337 = dma.vmem_to_hbm [thread:$0]  %s330, 256, %s332, [#allocation4], 128, 128, 8
    $region49: #{tpu_custom_call.1} parent=1 // pred_fallthru
      _
    // Predicated region
    $region50: #{tpu_custom_call.1} parent=1 // pred_check
      _
    $region51: #{tpu_custom_call.1} parent=1 // pred_check_branch
      %339 = sbr.rel (0) target = $region53
    $region52: #{tpu_custom_call.1} parent=1 // pred_region
      %341 = dma.done [#allocation4], 256
    $region53: #{tpu_custom_call.1} parent=1 // pred_fallthru
      _
    %342 = vsyncpa [#allocation3], 1
    %343 = vsyncpa [#allocation6], 1
    %344 = vsyncpa [#allocation9], 1
    %345 = vsyncpa [#allocation4], 1

</llo_original>
